<compile_context>
chip_gen: v5e
topology: v5e:2x2
jax: 0.10.0
libtpu: 0.0.40
codegen_flags: <defaults>
</compile_context>

<pallas_src>
import functools

import jax
import jax.numpy as jnp
from jax.experimental import pallas as pl
from jax.experimental.pallas import tpu as pltpu


_LANES = 128
_NEG_LARGE = float(jnp.finfo(jnp.float32).min)

# Block-size policy (payload bytes per pipelined block).
_TARGET_BLOCK_BYTES = 2 * 1024 * 1024   # 1-4 MiB blocks sit at ~85%+ of HBM roofline
_MIN_BLOCK_BYTES = 1 * 1024 * 1024      # never shrink below this to manufacture steps
# in + out, double-buffered = 4 live tile copies -> ~8 MiB of block buffers,
# leaving plenty of headroom for spills under a 32 MiB scoped limit (<= v7x's
# 64 MiB physical VMEM; comfortable on v5e/v6e's 128 MiB).
_VMEM_LIMIT_BYTES = 32 * 1024 * 1024
_COLUMN_PATH_BUDGET = 24 * 1024 * 1024  # if a min-height row block needs more, tile H


def _round_up(n, m):
    return ((n + m - 1) // m) * m


def _floor_to(n, m):
    return max(m, (n // m) * m)


def _min_sublane_rows(dtype):
    # Minimum sublane tile: 8 rows for 32-bit, 16 for 16-bit, 32 for 8-bit dtypes.
    bits = jnp.dtype(dtype).itemsize * 8
    return max(8, 256 // bits)


def _is_v7x():
    try:
        kind = jax.devices()[0].device_kind.lower()
    except Exception:
        return False
    return ("v7" in kind) or ("tpu7" in kind)


def _pick_tile_rows(num_rows, padded_row_bytes, dtype):
    """Rows per block: bytes-targeted, padding-aware, sublane- and TC-aware."""
    min_rows = _min_sublane_rows(dtype)
    if num_rows <= min_rows:
        return num_rows                       # one short block; block dim == array dim
    max_rows = _floor_to(num_rows, min_rows)  # never make the block taller than the array
    rows = max(min_rows, _TARGET_BLOCK_BYTES // padded_row_bytes)
    rows = min(rows, max_rows)
    # v7x has 2 TensorCores -> aim for >= 4 grid steps (2 per core); v5e/v6e only
    # need 2 for DMA/compute overlap.  Never shrink a block below ~1 MiB for this.
    min_steps = 4 if _is_v7x() else 2
    capped = _round_up(-(-num_rows // min_steps), min_rows)
    if capped * padded_row_bytes >= _MIN_BLOCK_BYTES:
        rows = min(rows, capped)
    return _floor_to(rows, min_rows)


# ----------------------------------------------------------------------------
# Row-tiled path (small / moderate H), with optional lane-packing for H < 128.
# ----------------------------------------------------------------------------
def _log_softmax_rows_kernel(x_ref, o_ref, *, n_seg, seg_w):
    # x_ref/o_ref: (TILE_R, n_seg*seg_w) block.  Each physical row holds n_seg
    # independent logical rows of width seg_w packed along the lane axis, so
    # every reduction below is per segment (per logical row).
    #
    # NOTE: padding rows of the last partial block contain uninitialized data
    # and flow through exp/log; all reductions are per-row/per-segment and
    # Pallas masks the writeback, so they cannot contaminate valid rows.
    # Do NOT "fix" this by adding a row mask inside the reduction.
    x = x_ref[...].astype(jnp.float32)  # upcast before max/sub: exact f32 math and
                                        # no emulated bf16 VALU ops on v5e.
    pieces = []
    for s in range(n_seg):
        xs = x[:, s * seg_w:(s + 1) * seg_w]
        m = jnp.max(xs, axis=-1, keepdims=True)
        sf = xs - m
        lse = jnp.log(jnp.sum(jnp.exp(sf), axis=-1, keepdims=True))
        pieces.append(sf - lse)
    out = pieces[0] if n_seg == 1 else jnp.concatenate(pieces, axis=-1)
    o_ref[...] = out.astype(o_ref.dtype)


def _log_softmax_rows(x2, n_seg, seg_w, tile_r=None):
    num_rows, w = x2.shape
    dtype = x2.dtype
    itemsize = dtype.itemsize
    padded_row_bytes = _round_up(w, _LANES) * itemsize   # lane-padding-aware
    if tile_r is None:
        tile_r = _pick_tile_rows(num_rows, padded_row_bytes, dtype)
    grid = (pl.cdiv(num_rows, tile_r),)

    n_elems = num_rows * w
    cost = pl.CostEstimate(
        flops=5 * n_elems,
        transcendentals=n_elems + num_rows * n_seg,
        bytes_accessed=2 * n_elems * itemsize,
    )
    kernel = functools.partial(_log_softmax_rows_kernel, n_seg=n_seg, seg_w=seg_w)
    return pl.pallas_call(
        kernel,
        out_shape=jax.ShapeDtypeStruct((num_rows, w), dtype),
        grid_spec=pltpu.PrefetchScalarGridSpec(
            num_scalar_prefetch=0,
            grid=grid,
            in_specs=[pl.BlockSpec((tile_r, w), lambda r: (r, 0))],
            out_specs=pl.BlockSpec((tile_r, w), lambda r: (r, 0)),
        ),
        compiler_params=pltpu.CompilerParams(
            dimension_semantics=("parallel",),
            vmem_limit_bytes=_VMEM_LIMIT_BYTES,
        ),
        cost_estimate=cost,
    )(x2)


# ----------------------------------------------------------------------------
# Column-tiled two-pass path for vocab-sized H (flash-softmax style).
# ----------------------------------------------------------------------------
def _lse_stats_kernel(x_ref, z_ref, m_sc, l_sc, *, h, tile_c):
    c = pl.program_id(1)

    @pl.when(c == 0)
    def _():
        m_sc[...] = jnp.full(m_sc.shape, _NEG_LARGE, dtype=jnp.float32)
        l_sc[...] = jnp.zeros(l_sc.shape, dtype=jnp.float32)

    x = x_ref[...].astype(jnp.float32)
    # Mask out padding columns of the last partial H-block (they WOULD corrupt
    # the reduction since the reduction runs along the padded axis).
    col = c * tile_c + jax.lax.broadcasted_iota(jnp.int32, x.shape, 1)
    valid = col < h
    xm = jnp.where(valid, x, _NEG_LARGE)
    m_new = jnp.maximum(m_sc[...], jnp.max(xm, axis=-1, keepdims=True))
    p = jnp.where(valid, jnp.exp(x - m_new), 0.0)
    l_sc[...] = l_sc[...] * jnp.exp(m_sc[...] - m_new) + jnp.sum(p, axis=-1, keepdims=True)
    m_sc[...] = m_new

    @pl.when(c == pl.num_programs(1) - 1)
    def _():
        z_ref[...] = m_sc[...] + jnp.log(l_sc[...])


def _apply_lse_kernel(x_ref, z_ref, o_ref):
    o_ref[...] = (x_ref[...].astype(jnp.float32) - z_ref[...]).astype(o_ref.dtype)


def _log_softmax_columns(x2, *, tile_c=None):
    num_rows, h = x2.shape
    dtype = x2.dtype
    itemsize = dtype.itemsize
    min_rows = _min_sublane_rows(dtype)

    if num_rows <= min_rows:
        tile_r = num_rows
    else:
        tile_r = min(8 * min_rows, _floor_to(num_rows, min_rows))
    if tile_c is None:
        tile_c = max(_LANES, (_TARGET_BLOCK_BYTES // (tile_r * itemsize)) // _LANES * _LANES)
    if tile_c >= h:
        tile_c = h

    grid = (pl.cdiv(num_rows, tile_r), pl.cdiv(h, tile_c))
    n_elems = num_rows * h

    # Pass 1: per-row logsumexp (online max/sum over the "arbitrary" H axis).
    z = pl.pallas_call(
        functools.partial(_lse_stats_kernel, h=h, tile_c=tile_c),
        out_shape=jax.ShapeDtypeStruct((num_rows, 1), jnp.float32),
        grid_spec=pltpu.PrefetchScalarGridSpec(
            num_scalar_prefetch=0,
            grid=grid,
            in_specs=[pl.BlockSpec((tile_r, tile_c), lambda r, c: (r, c))],
            out_specs=pl.BlockSpec((tile_r, 1), lambda r, c: (r, 0)),
            scratch_shapes=[pltpu.VMEM((tile_r, 1), jnp.float32),
                            pltpu.VMEM((tile_r, 1), jnp.float32)],
        ),
        compiler_params=pltpu.CompilerParams(
            dimension_semantics=("parallel", "arbitrary"),
            vmem_limit_bytes=_VMEM_LIMIT_BYTES,
        ),
        cost_estimate=pl.CostEstimate(
            flops=4 * n_elems, transcendentals=n_elems,
            bytes_accessed=n_elems * itemsize + 4 * num_rows),
    )(x2)

    # Pass 2: out = x - logsumexp(x), fully parallel.
    out2 = pl.pallas_call(
        _apply_lse_kernel,
        out_shape=jax.ShapeDtypeStruct((num_rows, h), dtype),
        grid_spec=pltpu.PrefetchScalarGridSpec(
            num_scalar_prefetch=0,
            grid=grid,
            in_specs=[pl.BlockSpec((tile_r, tile_c), lambda r, c: (r, c)),
                      pl.BlockSpec((tile_r, 1), lambda r, c: (r, 0))],
            out_specs=pl.BlockSpec((tile_r, tile_c), lambda r, c: (r, c)),
        ),
        compiler_params=pltpu.CompilerParams(
            dimension_semantics=("parallel", "parallel"),
            vmem_limit_bytes=_VMEM_LIMIT_BYTES,
        ),
        cost_estimate=pl.CostEstimate(
            flops=n_elems, transcendentals=0,
            bytes_accessed=2 * n_elems * itemsize + 4 * num_rows),
    )(x2, z)
    return out2


# ----------------------------------------------------------------------------
# Public wrapper: FunctionalModule(partial(F.log_softmax, dim=-1)).forward
# ----------------------------------------------------------------------------
def functional_module_forward(x, *, force_column_path=False, column_tile_c=None,
                              _row_tile_r=None):
    """Pallas TPU implementation of FunctionalModule(log_softmax(dim=-1))."""
    orig_shape = x.shape
    h = int(orig_shape[-1])
    num_rows = 1
    for d in orig_shape[:-1]:
        num_rows *= int(d)

    x2 = x.reshape(num_rows, h)                    # free, contiguous collapse
    itemsize = x2.dtype.itemsize
    min_rows = _min_sublane_rows(x2.dtype)
    padded_h_bytes = _round_up(h, _LANES) * itemsize

    # Vocab-sized H: if even a minimum-height row block (double-buffered in+out
    # = 4 live copies) would blow the pipelined-VMEM budget, tile H instead.
    if force_column_path or 4 * min_rows * padded_h_bytes > _COLUMN_PATH_BUDGET:
        return _log_softmax_columns(x2, tile_c=column_tile_c).reshape(orig_shape)

    # Lane-pack small H (canonical H=32): without packing, vregs are only H/128
    # lane-utilized and stores are masked vst.msk.  Pack k = 128 // H logical
    # rows per physical row (free reshape) and reduce per segment in-kernel.
    n_seg, seg_w = 1, h
    if h < _LANES and _LANES % h == 0:
        k = _LANES // h
        if num_rows >= k and num_rows % k == 0:
            n_seg, seg_w = k, h
            x2 = x2.reshape(num_rows // k, k * h)

    out2 = _log_softmax_rows(x2, n_seg, seg_w, tile_r=_row_tile_r)
    return out2.reshape(orig_shape)


def _reference_log_softmax(x):
    xf = x.astype(jnp.float32)
    m = jnp.max(xf, axis=-1, keepdims=True)
    s = xf - m
    return s - jnp.log(jnp.sum(jnp.exp(s), axis=-1, keepdims=True))


if __name__ == "__main__":
    key = jax.random.PRNGKey(0)

    # 1) Canonical small shape (batch, seq, hidden): lane-packed single-block path.
    B, T, H = 2, 8, 32
    x = jax.random.normal(key, (B, T, H), dtype=jnp.float32)
    out = jax.block_until_ready(functional_module_forward(x))
    ref = _reference_log_softmax(x)
    assert out.shape == (B, T, H) and out.dtype == x.dtype
    assert jnp.max(jnp.abs(out - ref)) < 1e-5

    # 2) Multi-step row grid with a partial last block (row tile forced small).
    B2, T2, H2 = 3, 700, 32
    x2 = jax.random.normal(jax.random.PRNGKey(0), (B2, T2, H2), dtype=jnp.float32)
    out2 = jax.block_until_ready(functional_module_forward(x2, _row_tile_r=128))
    ref2 = _reference_log_softmax(x2)
    assert out2.shape == (B2, T2, H2)
    assert jnp.max(jnp.abs(out2 - ref2)) < 1e-5

    # 3) bf16 path (upcast-to-f32 inside the kernel, downcast on store).
    xb = jax.random.normal(jax.random.PRNGKey(1), (2, 8, 32), dtype=jnp.bfloat16)
    outb = jax.block_until_ready(functional_module_forward(xb))
    refb = _reference_log_softmax(xb)
    assert outb.dtype == jnp.bfloat16
    assert jnp.max(jnp.abs(outb.astype(jnp.float32) - refb)) < 5e-2

    # 4) Column-tiled two-pass path (forced at a small shape, incl. masked last
    #    H-block: 600 = 4*128 + 88).
    xc = jax.random.normal(jax.random.PRNGKey(2), (2, 8, 600), dtype=jnp.float32)
    outc = jax.block_until_ready(
        functional_module_forward(xc, force_column_path=True, column_tile_c=128))
    refc = _reference_log_softmax(xc)
    assert outc.shape == (2, 8, 600)
    assert jnp.max(jnp.abs(outc - refc)) < 1e-4

    print("KERNEL_OK")
</pallas_src>

<mosaic_0001>
module attributes {stable_mosaic.version = 11 : i64} {
  func.func @_log_softmax_rows_kernel(%arg0: i32, %arg1: memref<4x128xf32, #tpu.memory_space<vmem>>, %arg2: memref<4x128xf32, #tpu.memory_space<vmem>>) attributes {dimension_semantics = [#tpu.dimension_semantics<parallel>], iteration_bounds = array<i64: 1>, scalar_prefetch = 0 : i64, scratch_operands = 0 : i64, tpu.core_type = #tpu.core_type<tc>, window_params = [{transform_indices = @transform_0, window_bounds = array<i64: 4, 128>}, {transform_indices = @transform_1, window_bounds = array<i64: 4, 128>}]} {
    %c0 = arith.constant 0 : index
    %c0_0 = arith.constant 0 : index
    %0 = vector.load %arg1[%c0, %c0_0] : memref<4x128xf32, #tpu.memory_space<vmem>>, vector<4x128xf32>
    %1 = vector.extract_strided_slice %0 {offsets = [0, 0], sizes = [4, 32], strides = [1, 1]} : vector<4x128xf32> to vector<4x32xf32>
    %cst = arith.constant dense<0xFF800000> : vector<4xf32>
    %2 = vector.multi_reduction <maximumf>, %1, %cst [1] : vector<4x32xf32> to vector<4xf32>
    %3 = vector.shape_cast %2 : vector<4xf32> to vector<4x1xf32>
    %4 = vector.broadcast %3 : vector<4x1xf32> to vector<4x32xf32>
    %5 = arith.subf %1, %4 : vector<4x32xf32>
    %6 = math.exp %5 : vector<4x32xf32>
    %cst_1 = arith.constant dense<0.000000e+00> : vector<4xf32>
    %7 = vector.multi_reduction <add>, %6, %cst_1 [1] : vector<4x32xf32> to vector<4xf32>
    %8 = vector.shape_cast %7 : vector<4xf32> to vector<4x1xf32>
    %9 = math.log %8 : vector<4x1xf32>
    %10 = vector.broadcast %9 : vector<4x1xf32> to vector<4x32xf32>
    %11 = arith.subf %5, %10 : vector<4x32xf32>
    %12 = vector.extract_strided_slice %0 {offsets = [0, 32], sizes = [4, 32], strides = [1, 1]} : vector<4x128xf32> to vector<4x32xf32>
    %cst_2 = arith.constant dense<0xFF800000> : vector<4xf32>
    %13 = vector.multi_reduction <maximumf>, %12, %cst_2 [1] : vector<4x32xf32> to vector<4xf32>
    %14 = vector.shape_cast %13 : vector<4xf32> to vector<4x1xf32>
    %15 = vector.broadcast %14 : vector<4x1xf32> to vector<4x32xf32>
    %16 = arith.subf %12, %15 : vector<4x32xf32>
    %17 = math.exp %16 : vector<4x32xf32>
    %cst_3 = arith.constant dense<0.000000e+00> : vector<4xf32>
    %18 = vector.multi_reduction <add>, %17, %cst_3 [1] : vector<4x32xf32> to vector<4xf32>
    %19 = vector.shape_cast %18 : vector<4xf32> to vector<4x1xf32>
    %20 = math.log %19 : vector<4x1xf32>
    %21 = vector.broadcast %20 : vector<4x1xf32> to vector<4x32xf32>
    %22 = arith.subf %16, %21 : vector<4x32xf32>
    %23 = vector.extract_strided_slice %0 {offsets = [0, 64], sizes = [4, 32], strides = [1, 1]} : vector<4x128xf32> to vector<4x32xf32>
    %cst_4 = arith.constant dense<0xFF800000> : vector<4xf32>
    %24 = vector.multi_reduction <maximumf>, %23, %cst_4 [1] : vector<4x32xf32> to vector<4xf32>
    %25 = vector.shape_cast %24 : vector<4xf32> to vector<4x1xf32>
    %26 = vector.broadcast %25 : vector<4x1xf32> to vector<4x32xf32>
    %27 = arith.subf %23, %26 : vector<4x32xf32>
    %28 = math.exp %27 : vector<4x32xf32>
    %cst_5 = arith.constant dense<0.000000e+00> : vector<4xf32>
    %29 = vector.multi_reduction <add>, %28, %cst_5 [1] : vector<4x32xf32> to vector<4xf32>
    %30 = vector.shape_cast %29 : vector<4xf32> to vector<4x1xf32>
    %31 = math.log %30 : vector<4x1xf32>
    %32 = vector.broadcast %31 : vector<4x1xf32> to vector<4x32xf32>
    %33 = arith.subf %27, %32 : vector<4x32xf32>
    %34 = vector.extract_strided_slice %0 {offsets = [0, 96], sizes = [4, 32], strides = [1, 1]} : vector<4x128xf32> to vector<4x32xf32>
    %cst_6 = arith.constant dense<0xFF800000> : vector<4xf32>
    %35 = vector.multi_reduction <maximumf>, %34, %cst_6 [1] : vector<4x32xf32> to vector<4xf32>
    %36 = vector.shape_cast %35 : vector<4xf32> to vector<4x1xf32>
    %37 = vector.broadcast %36 : vector<4x1xf32> to vector<4x32xf32>
    %38 = arith.subf %34, %37 : vector<4x32xf32>
    %39 = math.exp %38 : vector<4x32xf32>
    %cst_7 = arith.constant dense<0.000000e+00> : vector<4xf32>
    %40 = vector.multi_reduction <add>, %39, %cst_7 [1] : vector<4x32xf32> to vector<4xf32>
    %41 = vector.shape_cast %40 : vector<4xf32> to vector<4x1xf32>
    %42 = math.log %41 : vector<4x1xf32>
    %43 = vector.broadcast %42 : vector<4x1xf32> to vector<4x32xf32>
    %44 = arith.subf %38, %43 : vector<4x32xf32>
    %45 = tpu.concatenate %11, %22, %33, %44 in 1 : vector<4x32xf32>, vector<4x32xf32>, vector<4x32xf32>, vector<4x32xf32> -> vector<4x128xf32>
    %c0_8 = arith.constant 0 : index
    %c0_9 = arith.constant 0 : index
    %46 = vector.load %arg2[%c0_8, %c0_9] : memref<4x128xf32, #tpu.memory_space<vmem>>, vector<4x128xf32>
    tpu.vector_store %arg2[%c0_8, %c0_9], %45 {strides = array<i32>} : memref<4x128xf32, #tpu.memory_space<vmem>>, vector<4x128xf32>,
    return
  }
  func.func @transform_0(%arg0: i32) -> (i32, i32) {
    %c0_i32 = arith.constant 0 : i32
    %c0_i32_0 = arith.constant 0 : i32
    return %arg0, %c0_i32 : i32, i32
  }
  func.func @transform_1(%arg0: i32) -> (i32, i32) {
    %c0_i32 = arith.constant 0 : i32
    %c0_i32_0 = arith.constant 0 : i32
    return %arg0, %c0_i32 : i32, i32
  }
}

</mosaic_0001>

<llo_original>
// kernel: tpu_custom_call.1
$region0: #{tpu_custom_call.1}
  #allocation0 [shape = 'u32[]', space=smem, size = 0x4, offset = 0x4, fixed_abs, tag = 'smem constant byte address 0x4 - core index']
  #allocation1 [shape = 'u32[72,128]{1,0:T(1,128)}', space=vmem, size = 0x9000, scoped, tag = 'internal scratch']
  %s0 = inlined_call_operand.hbm [shape: f32[4,128], index: 0, kind: input, shape index: {}]
  %s1 = inlined_call_operand.hbm [shape: f32[4,128], index: 1, kind: output, shape index: {}]
  %s2 = sld [smem:[#allocation0]]
  $region18: #{tpu_custom_call.1} parent=0
    _
  %s4 = ssub.s32 1, %s2
  %s5 = scalar_select 0, %s4, %s2
  $region1: #{tpu_custom_call.1} parent=0
    #allocation2 [shape = 'u8[2048]{0}', space=vmem, size = 0x800, scoped, tag = 'input window, operand 0, single buffered']
    #allocation3 [shape = 's32[1]{0}', space=sflag, size = 0x4, scoped, tag = 'scoped memory for tpu_custom_call.1']
    #allocation4 [shape = 's32[1]{0}', space=sflag, size = 0x4, scoped, tag = 'scoped memory for tpu_custom_call.1']
    #allocation5 [shape = 'u8[2048]{0}', space=vmem, size = 0x800, scoped, tag = 'output window, operand 0, single buffered']
    %6 = vsyncpa [#allocation3], 0
    %7 = vsyncpa [#allocation4], 0
    // Predicated region
    $region2: #{tpu_custom_call.1} parent=1 // pred_check
      _
    $region3: #{tpu_custom_call.1} parent=1 // pred_check_branch
      %9 = sbr.rel (0) target = $region5
    $region4: #{tpu_custom_call.1} parent=1 // pred_region
      %11 = vsyncadd [#allocation3], 0
      %s13 = sshll.u32 %s0, 4
      %s14 = int_to_ptr.hbm [resolvable:$true] %s13
      %s15 = sshll.u32 [#allocation2], 4
      %s16 = int_to_ptr.vmem [resolvable:$true] %s15
      %18 = dma.hbm_to_vmem [thread:$0]  %s14, 64, %s16, [#allocation3]
    $region5: #{tpu_custom_call.1} parent=1 // pred_fallthru
      _
    // Predicated region
    $region6: #{tpu_custom_call.1} parent=1 // pred_check
      _
    $region7: #{tpu_custom_call.1} parent=1 // pred_check_branch
      %20 = sbr.rel (0) target = $region9
    $region8: #{tpu_custom_call.1} parent=1 // pred_region
      %22 = dma.done [#allocation3], 64
    $region9: #{tpu_custom_call.1} parent=1 // pred_fallthru
      _
    %v23 = vld [vmem:[#allocation2] sm:$0xf]
    %vm24 = vcmask 257024
    %v25 = vsel %vm24, %v23, -inf
    %26 = vmax.xlane.f32.xlu0 %v25
    %v27 = vpop.xlane.xlu0 %26
    %v28 = vsub.f32 %v23, %v27
    %v29 = vmul.f32 %v28, 1.442695
    %v30 = vpow.pop %v29
    %v31 = vsel %vm24, %v30, 0.0
    %32 = vadd.xlane.f32.xlu0 %v31
    %v33 = vpop.xlane.xlu0 %32
    %v34 = vlog2.pop %v33
    %v35 = vmul.f32 %v34, 0.6931472
    %v36 = vsub.f32 %v28, %v35
    %vm37 = vcmask 519424
    %v38 = vsel %vm37, %v23, -inf
    %39 = vmax.xlane.f32.xlu0 %v38
    %v40 = vpop.xlane.xlu0 %39
    %v41 = vsub.f32 %v23, %v40
    %v42 = vmul.f32 %v41, 1.442695
    %v43 = vpow.pop %v42
    %45 = vrot.lane.b32.xlu0 %v43, 96
    %v46 = vpop.permute.xlu0 %45
    %v48 = vsel %vm24, %v46, 0.0
    %49 = vadd.xlane.f32.xlu0 %v48
    %v50 = vpop.xlane.xlu0 %49
    %v51 = vlog2.pop %v50
    %v52 = vmul.f32 %v51, 0.6931472
    %v53 = vsub.f32 %v41, %v52
    %vm54 = vcmask 781824
    %v55 = vsel %vm54, %v23, -inf
    %56 = vmax.xlane.f32.xlu0 %v55
    %v57 = vpop.xlane.xlu0 %56
    %v58 = vsub.f32 %v23, %v57
    %v59 = vmul.f32 %v58, 1.442695
    %v60 = vpow.pop %v59
    %62 = vrot.lane.b32.xlu0 %v60, 64
    %v63 = vpop.permute.xlu0 %62
    %v65 = vsel %vm24, %v63, 0.0
    %66 = vadd.xlane.f32.xlu0 %v65
    %v67 = vpop.xlane.xlu0 %66
    %v68 = vlog2.pop %v67
    %v69 = vmul.f32 %v68, 0.6931472
    %v70 = vsub.f32 %v58, %v69
    %vm71 = vcmask 1044224
    %v72 = vsel %vm71, %v23, -inf
    %73 = vmax.xlane.f32.xlu0 %v72
    %v74 = vpop.xlane.xlu0 %73
    %v75 = vsub.f32 %v23, %v74
    %v76 = vmul.f32 %v75, 1.442695
    %v77 = vpow.pop %v76
    %79 = vrot.lane.b32.xlu0 %v77, 32
    %v80 = vpop.permute.xlu0 %79
    %v82 = vsel %vm24, %v80, 0.0
    %83 = vadd.xlane.f32.xlu0 %v82
    %v84 = vpop.xlane.xlu0 %83
    %v85 = vlog2.pop %v84
    %v86 = vmul.f32 %v85, 0.6931472
    %v87 = vsub.f32 %v75, %v86
    %vm88 = vcmask 261120
    %v89 = vsel %vm88, %v36, %v53
    %vm90 = vcmask 523264
    %v91 = vsel %vm90, %v89, %v70
    %vm92 = vcmask 785408
    %v93 = vsel %vm92, %v91, %v87
    %94 = vst [vmem:[#allocation5] sm:$0xf] %v93
    // Predicated region
    $region10: #{tpu_custom_call.1} parent=1 // pred_check
      _
    $region11: #{tpu_custom_call.1} parent=1 // pred_check_branch
      %96 = sbr.rel (0) target = $region13
    $region12: #{tpu_custom_call.1} parent=1 // pred_region
      %98 = vsyncadd [#allocation4], 0
      %s100 = sshll.u32 [#allocation5], 4
      %s101 = int_to_ptr.vmem [resolvable:$true] %s100
      %s102 = sshll.u32 %s1, 4
      %s103 = int_to_ptr.hbm [resolvable:$true] %s102
      %105 = dma.vmem_to_hbm [thread:$0]  %s101, 64, %s103, [#allocation4]
    $region13: #{tpu_custom_call.1} parent=1 // pred_fallthru
      _
    // Predicated region
    $region14: #{tpu_custom_call.1} parent=1 // pred_check
      _
    $region15: #{tpu_custom_call.1} parent=1 // pred_check_branch
      %107 = sbr.rel (0) target = $region17
    $region16: #{tpu_custom_call.1} parent=1 // pred_region
      %109 = dma.done [#allocation4], 64
    $region17: #{tpu_custom_call.1} parent=1 // pred_fallthru
      _
    %110 = vsyncpa [#allocation3], 1
    %111 = vsyncpa [#allocation4], 1

</llo_original>
